<compile_context>
chip_gen: v6e
topology: v6e:2x2x1
jax: 0.10.0
libtpu: 0.0.40
codegen_flags: <defaults>
</compile_context>

<pallas_src>
import jax
import jax.numpy as jnp
from jax.experimental import pallas as pl
from jax.experimental.pallas import tpu as pltpu


def _round_up(x, m):
    return (x + m - 1) // m * m


# Per-tile working-set target: fits v7x's 64 MiB physical VMEM with >25%
# headroom for Mosaic scratch; well under v5e/v6e's 128 MiB physical.
_VMEM_BUDGET = 40 * 1024 * 1024


def _vmem_estimate_bytes(tile_b, state_dim, h_pad):
    """Conservative per-grid-step VMEM working-set estimate (bytes)."""
    x_buf = 2 * tile_b * state_dim * 4                      # f32 input, double-buffered
    out_buf = 2 * tile_b * 4                                # f32 (tile_b, 1) out, double-buffered
    weights = (state_dim * h_pad + 2 * h_pad * h_pad) * 2   # resident bf16, single-buffered
    biases = (4 * h_pad + 1) * 4                            # b1-b3 + w4 row + b4 (f32)
    inter = 3 * tile_b * h_pad * 4 + tile_b * h_pad * 2     # live f32 h copies + bf16 cast
    return x_buf + out_buf + weights + biases + inter


def _value_net_kernel(x_ref,
                      w1_ref, b1_ref,
                      w2_ref, b2_ref,
                      w3_ref, b3_ref,
                      w4_ref, b4_ref,
                      out_ref):
    """One batch tile of the MLP forward. Weights/biases are VMEM-resident."""
    # In-kernel f32 -> bf16 cast (VPU, free) saves a whole host-side HBM pass.
    x = x_ref[...].astype(jnp.bfloat16)

    # layer 1: Linear(state_dim -> hidden) + ReLU   (bf16 MXU, f32 accumulate)
    h = jnp.dot(x, w1_ref[...], preferred_element_type=jnp.float32)
    h = jnp.maximum(h + b1_ref[...], 0.0)

    # layer 2: Linear(hidden -> hidden) + ReLU
    h = jnp.dot(h.astype(jnp.bfloat16), w2_ref[...],
                preferred_element_type=jnp.float32)
    h = jnp.maximum(h + b2_ref[...], 0.0)

    # layer 3: Linear(hidden -> hidden) + ReLU
    h = jnp.dot(h.astype(jnp.bfloat16), w3_ref[...],
                preferred_element_type=jnp.float32)
    h = jnp.maximum(h + b3_ref[...], 0.0)

    # layer 4: Linear(hidden -> 1) as a VPU multiply + cross-lane reduction.
    # keepdims gives a (tile_b, 1) column already in natural sublane-major
    # layout -> no XLU relayout, and the narrow store is only tile_b*4 bytes.
    y = jnp.sum(h * w4_ref[...], axis=-1, keepdims=True)
    out_ref[...] = (y + b4_ref[...]).astype(out_ref.dtype)


def value_network_forward(state, params, *, max_tile_b=4096):
    """state: [B, state_dim] float. params: dict from init_params.

    Returns [B, 1] float32, matching the PyTorch module's contract.
    """
    B, state_dim = state.shape
    hidden_dim = params["w1"].shape[1]
    H_pad = _round_up(hidden_dim, 128)

    # ---------------- batch tile selection --------------------------------
    B_ru = _round_up(B, 128)
    tile_b = min(max_tile_b, B_ru)
    # v7x megacore: guarantee >= 2 grid steps whenever the batch allows it so
    # dimension_semantics=("parallel",) can shard the grid across both TCs.
    if B_ru >= 256:
        tile_b = min(tile_b, _round_up(pl.cdiv(B_ru, 2), 128))
    tile_b = max(tile_b, 128)
    # Shrink the tile if the per-step working set would blow the VMEM budget
    # (matters when hidden_dim is large).
    while tile_b > 128 and _vmem_estimate_bytes(tile_b, state_dim, H_pad) > _VMEM_BUDGET:
        tile_b = max(128, _round_up(tile_b // 2, 128))

    B_pad = _round_up(B, tile_b)
    num_tiles = B_pad // tile_b

    # ---------------- inputs: NO feature-dim padding, NO host-side cast ----
    x = state
    if B_pad != B:
        x = jnp.pad(x, ((0, B_pad - B), (0, 0)))   # zero rows, sliced away below

    # ---------------- weights: pad hidden dim only (zero padding is exact) -
    def pad2(a, rows, cols):
        return jnp.pad(a, ((0, rows - a.shape[0]), (0, cols - a.shape[1])))

    w1 = pad2(params["w1"], state_dim, H_pad).astype(jnp.bfloat16)   # [S,  H_pad]
    w2 = pad2(params["w2"], H_pad, H_pad).astype(jnp.bfloat16)       # [H_pad, H_pad]
    w3 = pad2(params["w3"], H_pad, H_pad).astype(jnp.bfloat16)
    b1 = pad2(params["b1"], 1, H_pad).astype(jnp.float32)            # [1, H_pad]
    b2 = pad2(params["b2"], 1, H_pad).astype(jnp.float32)
    b3 = pad2(params["b3"], 1, H_pad).astype(jnp.float32)
    # w4 stored [hidden, 1]; present as an f32 [1, H_pad] row for the VPU reduce.
    w4 = pad2(params["w4"].reshape(1, -1), 1, H_pad).astype(jnp.float32)
    b4 = params["b4"].astype(jnp.float32)                            # [1, 1]

    # Resident weights/biases: constant index map, single-buffered (never
    # re-fetched, so double-buffering would only burn VMEM).
    def resident(a):
        return pl.BlockSpec(a.shape, lambda i: (0, 0),
                            pipeline_mode=pl.Buffered(1))

    flops = 2 * B_pad * (state_dim * H_pad + 2 * H_pad * H_pad + H_pad)
    bytes_accessed = (B_pad * state_dim * 4
                      + (w1.size + w2.size + w3.size) * 2
                      + (b1.size + b2.size + b3.size + w4.size + b4.size) * 4
                      + B_pad * 4)

    est = _vmem_estimate_bytes(tile_b, state_dim, H_pad)
    vmem_limit = int(min(60 * 1024 * 1024,
                         max(est * 5 // 4, 32 * 1024 * 1024)))

    out = pl.pallas_call(
        _value_net_kernel,
        out_shape=jax.ShapeDtypeStruct((B_pad, 1), jnp.float32),
        grid_spec=pltpu.PrefetchScalarGridSpec(
            num_scalar_prefetch=0,
            grid=(num_tiles,),
            in_specs=[
                # last block dim == full array dim -> legal without 128-padding
                pl.BlockSpec((tile_b, state_dim), lambda i: (i, 0)),
                resident(w1), resident(b1),
                resident(w2), resident(b2),
                resident(w3), resident(b3),
                resident(w4), resident(b4),
            ],
            out_specs=pl.BlockSpec((tile_b, 1), lambda i: (i, 0)),
        ),
        compiler_params=pltpu.CompilerParams(
            dimension_semantics=("parallel",),
            vmem_limit_bytes=vmem_limit),
        cost_estimate=pl.CostEstimate(flops=flops,
                                      transcendentals=0,
                                      bytes_accessed=bytes_accessed),
    )(x, w1, b1, w2, b2, w3, b3, w4, b4)

    return out[:B]   # [B, 1], padded batch rows sliced away


def init_params(key, state_dim, hidden_dim, init_w=0.003):
    """Mirrors PyTorch nn.Linear defaults + the custom uniform init on linear4.
    Weights stored pre-transposed as [in, out]; biases as [1, out]."""
    ks = jax.random.split(key, 8)

    def linear_init(kw, kb, fan_in, fan_out):
        bound = 1.0 / jnp.sqrt(jnp.float32(fan_in))
        w = jax.random.uniform(kw, (fan_in, fan_out), jnp.float32, -bound, bound)
        b = jax.random.uniform(kb, (1, fan_out), jnp.float32, -bound, bound)
        return w, b

    w1, b1 = linear_init(ks[0], ks[1], state_dim, hidden_dim)
    w2, b2 = linear_init(ks[2], ks[3], hidden_dim, hidden_dim)
    w3, b3 = linear_init(ks[4], ks[5], hidden_dim, hidden_dim)
    w4 = jax.random.uniform(ks[6], (hidden_dim, 1), jnp.float32, -init_w, init_w)
    b4 = jax.random.uniform(ks[7], (1, 1), jnp.float32, -init_w, init_w)

    return {"w1": w1, "b1": b1, "w2": w2, "b2": b2,
            "w3": w3, "b3": b3, "w4": w4, "b4": b4}


def reference_forward(state, params):
    """Pure-JAX reference mirroring the kernel numerics (bf16 MXU inputs,
    f32 accumulation, f32 bias/ReLU, VPU-style reduction for the final layer)."""
    bf16 = lambda a: a.astype(jnp.bfloat16)
    h = jnp.dot(bf16(state), bf16(params["w1"]),
                preferred_element_type=jnp.float32) + params["b1"]
    h = jnp.maximum(h, 0.0)
    h = jnp.dot(bf16(h), bf16(params["w2"]),
                preferred_element_type=jnp.float32) + params["b2"]
    h = jnp.maximum(h, 0.0)
    h = jnp.dot(bf16(h), bf16(params["w3"]),
                preferred_element_type=jnp.float32) + params["b3"]
    h = jnp.maximum(h, 0.0)
    w4_row = params["w4"].reshape(1, -1)
    return jnp.sum(h * w4_row, axis=-1, keepdims=True) + params["b4"]


if __name__ == "__main__":
    key = jax.random.PRNGKey(0)
    k_params, k_state = jax.random.split(key)

    batch, state_dim, hidden_dim = 2, 16, 32
    params = init_params(k_params, state_dim, hidden_dim)
    state = jax.random.normal(k_state, (batch, state_dim), jnp.float32)

    out = value_network_forward(state, params)
    out = jax.block_until_ready(out)

    ref = reference_forward(state, params)
    assert out.shape == (batch, 1), out.shape
    assert jnp.allclose(out, ref, atol=1e-4, rtol=1e-4), (out, ref)

    print("KERNEL_OK")
</pallas_src>

<mosaic_0001>
module attributes {stable_mosaic.version = 11 : i64} {
  func.func @_value_net_kernel(%arg0: i32, %arg1: memref<128x16xf32, #tpu.memory_space<vmem>>, %arg2: memref<16x128xbf16, #tpu.memory_space<vmem>>, %arg3: memref<1x128xf32, #tpu.memory_space<vmem>>, %arg4: memref<128x128xbf16, #tpu.memory_space<vmem>>, %arg5: memref<1x128xf32, #tpu.memory_space<vmem>>, %arg6: memref<128x128xbf16, #tpu.memory_space<vmem>>, %arg7: memref<1x128xf32, #tpu.memory_space<vmem>>, %arg8: memref<1x128xf32, #tpu.memory_space<vmem>>, %arg9: memref<1x1xf32, #tpu.memory_space<vmem>>, %arg10: memref<128x1xf32, #tpu.memory_space<vmem>>) attributes {dimension_semantics = [#tpu.dimension_semantics<parallel>], iteration_bounds = array<i64: 1>, scalar_prefetch = 0 : i64, scratch_operands = 0 : i64, tpu.core_type = #tpu.core_type<tc>, window_params = [{transform_indices = @transform_0, window_bounds = array<i64: 128, 16>}, {pipeline_mode = #tpu.pipeline_mode<synchronous>, transform_indices = @transform_1, window_bounds = array<i64: 16, 128>}, {pipeline_mode = #tpu.pipeline_mode<synchronous>, transform_indices = @transform_2, window_bounds = array<i64: 1, 128>}, {pipeline_mode = #tpu.pipeline_mode<synchronous>, transform_indices = @transform_3, window_bounds = array<i64: 128, 128>}, {pipeline_mode = #tpu.pipeline_mode<synchronous>, transform_indices = @transform_4, window_bounds = array<i64: 1, 128>}, {pipeline_mode = #tpu.pipeline_mode<synchronous>, transform_indices = @transform_5, window_bounds = array<i64: 128, 128>}, {pipeline_mode = #tpu.pipeline_mode<synchronous>, transform_indices = @transform_6, window_bounds = array<i64: 1, 128>}, {pipeline_mode = #tpu.pipeline_mode<synchronous>, transform_indices = @transform_7, window_bounds = array<i64: 1, 128>}, {pipeline_mode = #tpu.pipeline_mode<synchronous>, transform_indices = @transform_8, window_bounds = array<i64: 1, 1>}, {transform_indices = @transform_9, window_bounds = array<i64: 128, 1>}]} {
    %c0 = arith.constant 0 : index
    %c0_0 = arith.constant 0 : index
    %0 = vector.load %arg1[%c0, %c0_0] : memref<128x16xf32, #tpu.memory_space<vmem>>, vector<128x16xf32>
    %1 = arith.truncf %0 : vector<128x16xf32> to vector<128x16xbf16>
    %c0_1 = arith.constant 0 : index
    %c0_2 = arith.constant 0 : index
    %2 = vector.load %arg2[%c0_1, %c0_2] : memref<16x128xbf16, #tpu.memory_space<vmem>>, vector<16x128xbf16>
    %cst = arith.constant dense<0.000000e+00> : vector<128x128xf32>
    %3 = tpu.matmul %1, %2, %cst {dimension_numbers = #tpu.dot_dimension_numbers<[1], [0], [0], [1], [0, 0, 1, 1], [], []>} : vector<128x16xbf16>, vector<16x128xbf16>, vector<128x128xf32> -> vector<128x128xf32>
    %c0_3 = arith.constant 0 : index
    %c0_4 = arith.constant 0 : index
    %4 = vector.load %arg3[%c0_3, %c0_4] : memref<1x128xf32, #tpu.memory_space<vmem>>, vector<1x128xf32>
    %5 = vector.broadcast %4 : vector<1x128xf32> to vector<128x128xf32>
    %6 = arith.addf %3, %5 : vector<128x128xf32>
    %cst_5 = arith.constant 0.000000e+00 : f32
    %7 = vector.broadcast %cst_5 : f32 to vector<128x128xf32>
    %8 = arith.maximumf %6, %7 : vector<128x128xf32>
    %9 = arith.truncf %8 : vector<128x128xf32> to vector<128x128xbf16>
    %c0_6 = arith.constant 0 : index
    %c0_7 = arith.constant 0 : index
    %10 = vector.load %arg4[%c0_6, %c0_7] : memref<128x128xbf16, #tpu.memory_space<vmem>>, vector<128x128xbf16>
    %cst_8 = arith.constant dense<0.000000e+00> : vector<128x128xf32>
    %11 = tpu.matmul %9, %10, %cst_8 {dimension_numbers = #tpu.dot_dimension_numbers<[1], [0], [0], [1], [0, 0, 1, 1], [], []>} : vector<128x128xbf16>, vector<128x128xbf16>, vector<128x128xf32> -> vector<128x128xf32>
    %c0_9 = arith.constant 0 : index
    %c0_10 = arith.constant 0 : index
    %12 = vector.load %arg5[%c0_9, %c0_10] : memref<1x128xf32, #tpu.memory_space<vmem>>, vector<1x128xf32>
    %13 = vector.broadcast %12 : vector<1x128xf32> to vector<128x128xf32>
    %14 = arith.addf %11, %13 : vector<128x128xf32>
    %cst_11 = arith.constant 0.000000e+00 : f32
    %15 = vector.broadcast %cst_11 : f32 to vector<128x128xf32>
    %16 = arith.maximumf %14, %15 : vector<128x128xf32>
    %17 = arith.truncf %16 : vector<128x128xf32> to vector<128x128xbf16>
    %c0_12 = arith.constant 0 : index
    %c0_13 = arith.constant 0 : index
    %18 = vector.load %arg6[%c0_12, %c0_13] : memref<128x128xbf16, #tpu.memory_space<vmem>>, vector<128x128xbf16>
    %cst_14 = arith.constant dense<0.000000e+00> : vector<128x128xf32>
    %19 = tpu.matmul %17, %18, %cst_14 {dimension_numbers = #tpu.dot_dimension_numbers<[1], [0], [0], [1], [0, 0, 1, 1], [], []>} : vector<128x128xbf16>, vector<128x128xbf16>, vector<128x128xf32> -> vector<128x128xf32>
    %c0_15 = arith.constant 0 : index
    %c0_16 = arith.constant 0 : index
    %20 = vector.load %arg7[%c0_15, %c0_16] : memref<1x128xf32, #tpu.memory_space<vmem>>, vector<1x128xf32>
    %21 = vector.broadcast %20 : vector<1x128xf32> to vector<128x128xf32>
    %22 = arith.addf %19, %21 : vector<128x128xf32>
    %cst_17 = arith.constant 0.000000e+00 : f32
    %23 = vector.broadcast %cst_17 : f32 to vector<128x128xf32>
    %24 = arith.maximumf %22, %23 : vector<128x128xf32>
    %c0_18 = arith.constant 0 : index
    %c0_19 = arith.constant 0 : index
    %25 = vector.load %arg8[%c0_18, %c0_19] : memref<1x128xf32, #tpu.memory_space<vmem>>, vector<1x128xf32>
    %26 = vector.broadcast %25 : vector<1x128xf32> to vector<128x128xf32>
    %27 = arith.mulf %24, %26 : vector<128x128xf32>
    %cst_20 = arith.constant dense<0.000000e+00> : vector<128xf32>
    %28 = vector.multi_reduction <add>, %27, %cst_20 [1] : vector<128x128xf32> to vector<128xf32>
    %29 = vector.shape_cast %28 : vector<128xf32> to vector<128x1xf32>
    %c0_21 = arith.constant 0 : index
    %c0_22 = arith.constant 0 : index
    %30 = vector.load %arg9[%c0_21, %c0_22] : memref<1x1xf32, #tpu.memory_space<vmem>>, vector<1x1xf32>
    %31 = vector.broadcast %30 : vector<1x1xf32> to vector<128x1xf32>
    %32 = arith.addf %29, %31 : vector<128x1xf32>
    %c0_23 = arith.constant 0 : index
    %c0_24 = arith.constant 0 : index
    %33 = vector.load %arg10[%c0_23, %c0_24] : memref<128x1xf32, #tpu.memory_space<vmem>>, vector<128x1xf32>
    tpu.vector_store %arg10[%c0_23, %c0_24], %32 {strides = array<i32>} : memref<128x1xf32, #tpu.memory_space<vmem>>, vector<128x1xf32>,
    return
  }
  func.func @transform_0(%arg0: i32) -> (i32, i32) {
    %c0_i32 = arith.constant 0 : i32
    %c0_i32_0 = arith.constant 0 : i32
    return %arg0, %c0_i32 : i32, i32
  }
  func.func @transform_1(%arg0: i32) -> (i32, i32) {
    %c0_i32 = arith.constant 0 : i32
    %c0_i32_0 = arith.constant 0 : i32
    %c0_i32_1 = arith.constant 0 : i32
    return %c0_i32, %c0_i32_0 : i32, i32
  }
  func.func @transform_2(%arg0: i32) -> (i32, i32) {
    %c0_i32 = arith.constant 0 : i32
    %c0_i32_0 = arith.constant 0 : i32
    %c0_i32_1 = arith.constant 0 : i32
    return %c0_i32, %c0_i32_0 : i32, i32
  }
  func.func @transform_3(%arg0: i32) -> (i32, i32) {
    %c0_i32 = arith.constant 0 : i32
    %c0_i32_0 = arith.constant 0 : i32
    %c0_i32_1 = arith.constant 0 : i32
    return %c0_i32, %c0_i32_0 : i32, i32
  }
  func.func @transform_4(%arg0: i32) -> (i32, i32) {
    %c0_i32 = arith.constant 0 : i32
    %c0_i32_0 = arith.constant 0 : i32
    %c0_i32_1 = arith.constant 0 : i32
    return %c0_i32, %c0_i32_0 : i32, i32
  }
  func.func @transform_5(%arg0: i32) -> (i32, i32) {
    %c0_i32 = arith.constant 0 : i32
    %c0_i32_0 = arith.constant 0 : i32
    %c0_i32_1 = arith.constant 0 : i32
    return %c0_i32, %c0_i32_0 : i32, i32
  }
  func.func @transform_6(%arg0: i32) -> (i32, i32) {
    %c0_i32 = arith.constant 0 : i32
    %c0_i32_0 = arith.constant 0 : i32
    %c0_i32_1 = arith.constant 0 : i32
    return %c0_i32, %c0_i32_0 : i32, i32
  }
  func.func @transform_7(%arg0: i32) -> (i32, i32) {
    %c0_i32 = arith.constant 0 : i32
    %c0_i32_0 = arith.constant 0 : i32
    %c0_i32_1 = arith.constant 0 : i32
    return %c0_i32, %c0_i32_0 : i32, i32
  }
  func.func @transform_8(%arg0: i32) -> (i32, i32) {
    %c0_i32 = arith.constant 0 : i32
    %c0_i32_0 = arith.constant 0 : i32
    %c0_i32_1 = arith.constant 0 : i32
    return %c0_i32, %c0_i32_0 : i32, i32
  }
  func.func @transform_9(%arg0: i32) -> (i32, i32) {
    %c0_i32 = arith.constant 0 : i32
    %c0_i32_0 = arith.constant 0 : i32
    return %arg0, %c0_i32 : i32, i32
  }
}

</mosaic_0001>

<llo_original>
// kernel: tpu_custom_call.1
$region0: #{tpu_custom_call.1}
  #allocation0 [shape = 'u32[]', space=smem, size = 0x4, offset = 0x4, fixed_abs, tag = 'smem constant byte address 0x4 - core index']
  #allocation1 [shape = 'u32[144,128]{1,0:T(1,128)}', space=vmem, size = 0x12000, scoped, tag = 'internal scratch']
  #allocation2 [shape = 'f32[1,1]{1,0:T(1,128)S(1)}', space=vmem, size = 0x200, scoped, tag = 'scoped memory for tpu_custom_call.1']
  %s0 = inlined_call_operand.vmem [shape: f32[128,16], index: 0, kind: input, shape index: {}]
  %s1 = inlined_call_operand.vmem [shape: bf16[16,128], index: 1, kind: input, shape index: {}]
  %s2 = inlined_call_operand.vmem [shape: f32[1,128], index: 2, kind: input, shape index: {}]
  %s3 = inlined_call_operand.vmem [shape: bf16[128,128], index: 3, kind: input, shape index: {}]
  %s4 = inlined_call_operand.vmem [shape: f32[1,128], index: 4, kind: input, shape index: {}]
  %s5 = inlined_call_operand.vmem [shape: bf16[128,128], index: 5, kind: input, shape index: {}]
  %s6 = inlined_call_operand.vmem [shape: f32[1,128], index: 6, kind: input, shape index: {}]
  %s7 = inlined_call_operand.vmem [shape: f32[1,128], index: 7, kind: input, shape index: {}]
  %s8 = inlined_call_operand.<no memory space> [shape: f32[1,1], index: 8, kind: input, shape index: {}]
  %s9 = inlined_call_operand.vmem [shape: f32[128,1], index: 9, kind: output, shape index: {}]
  %s10 = sld [smem:[#allocation0]]
  $region46: #{tpu_custom_call.1} parent=0
    _
  %s12 = ssub.s32 1, %s10
  %s13 = scalar_select 0, %s12, %s10
  %v14 = vstv %s8
  %15 = vst [vmem:[#allocation2] sm:$0x1] %v14
  // Predicated region
  $region2: #{tpu_custom_call.1} parent=0 // pred_check
    _
  $region3: #{tpu_custom_call.1} parent=0 // pred_check_branch
    %17 = sbr.rel (0) target = $region5
  $region4: #{tpu_custom_call.1} parent=0 // pred_region
    _
  $region5: #{tpu_custom_call.1} parent=0 // pred_fallthru
    _
  // Predicated region
  $region6: #{tpu_custom_call.1} parent=0 // pred_check
    _
  $region7: #{tpu_custom_call.1} parent=0 // pred_check_branch
    %19 = sbr.rel (0) target = $region9
  $region8: #{tpu_custom_call.1} parent=0 // pred_region
    _
  $region9: #{tpu_custom_call.1} parent=0 // pred_fallthru
    _
  // Predicated region
  $region10: #{tpu_custom_call.1} parent=0 // pred_check
    _
  $region11: #{tpu_custom_call.1} parent=0 // pred_check_branch
    %21 = sbr.rel (0) target = $region13
  $region12: #{tpu_custom_call.1} parent=0 // pred_region
    _
  $region13: #{tpu_custom_call.1} parent=0 // pred_fallthru
    _
  // Predicated region
  $region14: #{tpu_custom_call.1} parent=0 // pred_check
    _
  $region15: #{tpu_custom_call.1} parent=0 // pred_check_branch
    %23 = sbr.rel (0) target = $region17
  $region16: #{tpu_custom_call.1} parent=0 // pred_region
    _
  $region17: #{tpu_custom_call.1} parent=0 // pred_fallthru
    _
  // Predicated region
  $region18: #{tpu_custom_call.1} parent=0 // pred_check
    _
  $region19: #{tpu_custom_call.1} parent=0 // pred_check_branch
    %25 = sbr.rel (0) target = $region21
  $region20: #{tpu_custom_call.1} parent=0 // pred_region
    _
  $region21: #{tpu_custom_call.1} parent=0 // pred_fallthru
    _
  // Predicated region
  $region22: #{tpu_custom_call.1} parent=0 // pred_check
    _
  $region23: #{tpu_custom_call.1} parent=0 // pred_check_branch
    %27 = sbr.rel (0) target = $region25
  $region24: #{tpu_custom_call.1} parent=0 // pred_region
    _
  $region25: #{tpu_custom_call.1} parent=0 // pred_fallthru
    _
  // Predicated region
  $region26: #{tpu_custom_call.1} parent=0 // pred_check
    _
  $region27: #{tpu_custom_call.1} parent=0 // pred_check_branch
    %29 = sbr.rel (0) target = $region29
  $region28: #{tpu_custom_call.1} parent=0 // pred_region
    _
  $region29: #{tpu_custom_call.1} parent=0 // pred_fallthru
    _
  // Predicated region
  $region30: #{tpu_custom_call.1} parent=0 // pred_check
    _
  $region31: #{tpu_custom_call.1} parent=0 // pred_check_branch
    %31 = sbr.rel (0) target = $region33
  $region32: #{tpu_custom_call.1} parent=0 // pred_region
    _
  $region33: #{tpu_custom_call.1} parent=0 // pred_fallthru
    _
  // Predicated region
  $region34: #{tpu_custom_call.1} parent=0 // pred_check
    _
  $region35: #{tpu_custom_call.1} parent=0 // pred_check_branch
    %33 = sbr.rel (0) target = $region37
  $region36: #{tpu_custom_call.1} parent=0 // pred_region
    _
  $region37: #{tpu_custom_call.1} parent=0 // pred_fallthru
    _
  %v35 = vld [vmem:[%s0] sm:$0xff]
  %v36 = vld [vmem:[%s0 + $0x8] sm:$0xff]
  %v37 = vld [vmem:[%s0 + $0x10] sm:$0xff]
  %v38 = vld [vmem:[%s0 + $0x18] sm:$0xff]
  %v39 = vld [vmem:[%s0 + $0x20] sm:$0xff]
  %v40 = vld [vmem:[%s0 + $0x28] sm:$0xff]
  %v41 = vld [vmem:[%s0 + $0x30] sm:$0xff]
  %v42 = vld [vmem:[%s0 + $0x38] sm:$0xff]
  %v43 = vld [vmem:[%s0 + $0x40] sm:$0xff]
  %v44 = vld [vmem:[%s0 + $0x48] sm:$0xff]
  %v45 = vld [vmem:[%s0 + $0x50] sm:$0xff]
  %v46 = vld [vmem:[%s0 + $0x58] sm:$0xff]
  %v47 = vld [vmem:[%s0 + $0x60] sm:$0xff]
  %v48 = vld [vmem:[%s0 + $0x68] sm:$0xff]
  %v49 = vld [vmem:[%s0 + $0x70] sm:$0xff]
  %v50 = vld [vmem:[%s0 + $0x78] sm:$0xff]
  %v51 = vpack.c.bf16 %v36, %v35
  %v52 = vpack.c.bf16 %v38, %v37
  %v53 = vpack.c.bf16 %v40, %v39
  %v54 = vpack.c.bf16 %v42, %v41
  %v55 = vpack.c.bf16 %v44, %v43
  %v56 = vpack.c.bf16 %v46, %v45
  %v57 = vpack.c.bf16 %v48, %v47
  %v58 = vpack.c.bf16 %v50, %v49
  %v59 = vld [vmem:[%s1] sm:$0xf]
  %v60 = vld [vmem:[%s1 + $0x4] sm:$0xf]
  %v61 = vld [vmem:[%s2] sm:$0x1]
  %v63 = vlaneseq
  %v64 = vshrl.u32 %v63, 7
  %v65 = vsub.s32 0, %v64
  %v66 = vrot.slane %v61, %v65
  %v70 = vunpack.c.l.b16 %v59
  %v71 = vunpack.c.l.b16 %v60
  %v72 = vpack.c.b16 %v71, %v70
  %vm74 = vcmask 130048
  %v76 = vsel %vm74, %v51, 0
  %v79 = vsel %vm74, %v52, 0
  %v82 = vsel %vm74, %v53, 0
  %v85 = vsel %vm74, %v54, 0
  %v88 = vsel %vm74, %v55, 0
  %v91 = vsel %vm74, %v56, 0
  %v94 = vsel %vm74, %v57, 0
  %v97 = vsel %vm74, %v58, 0
  %99 = vmatprep.subr.bf16.mxu0 0
  %100 = vmatpush1.bf16.msra.mxu0 0
  %101 = vmatprep.subr.bf16.mxu0 0
  %102 = vmatpush1.bf16.msra.mxu0 0
  %103 = vmatprep.subr.bf16.mxu0 0
  %104 = vmatpush1.bf16.msra.mxu0 0
  %105 = vmatprep.subr.bf16.mxu0 0
  %106 = vmatpush1.bf16.msra.mxu0 0
  %107 = vmatprep.subr.bf16.mxu0 0
  %108 = vmatpush1.bf16.msra.mxu0 0
  %109 = vmatprep.subr.bf16.mxu0 0
  %110 = vmatpush1.bf16.msra.mxu0 0
  %111 = vmatprep.subr.bf16.mxu0 0
  %112 = vmatpush1.bf16.msra.mxu0 0
  %113 = vmatprep.subr.bf16.mxu0 0
  %114 = vmatpush1.bf16.msra.mxu0 %v72
  %115 = vmatprep.subr.bf16.mxu0 0
  %116 = vmatpush2.bf16.msra.mxu0 0
  %117 = vmatprep.subr.bf16.mxu0 0
  %118 = vmatpush2.bf16.msra.mxu0 0
  %119 = vmatprep.subr.bf16.mxu0 0
  %120 = vmatpush2.bf16.msra.mxu0 0
  %121 = vmatprep.subr.bf16.mxu0 0
  %122 = vmatpush2.bf16.msra.mxu0 0
  %123 = vmatprep.subr.bf16.mxu0 0
  %124 = vmatpush2.bf16.msra.mxu0 0
  %125 = vmatprep.subr.bf16.mxu0 0
  %126 = vmatpush2.bf16.msra.mxu0 0
  %127 = vmatprep.subr.bf16.mxu0 0
  %128 = vmatpush2.bf16.msra.mxu0 0
  %129 = vmatprep.subr.bf16.mxu0 0
  %130 = vmatpush2.bf16.msra.mxu0 0
  %131 = vmatprep.mubr.bf16.mxu0 0
  %132 = vmatmul.mubr.bf16.gmra.mxu0 %v76
  %v133 = vpop.f32.mrf.mxu0
  %v134 = vadd.f32 %v66, %v133
  %v135 = vpop.f32.mrf.mxu0
  %v136 = vpop.f32.mrf.mxu0
  %v137 = vadd.f32 %v66, %v136
  %v138 = vpop.f32.mrf.mxu0
  %139 = vmatprep.mubr.bf16.mxu0 0
  %140 = vmatmul.mubr.bf16.gmra.mxu0 %v79
  %v141 = vpop.f32.mrf.mxu0
  %v142 = vadd.f32 %v66, %v141
  %v143 = vpop.f32.mrf.mxu0
  %v144 = vpop.f32.mrf.mxu0
  %v145 = vadd.f32 %v66, %v144
  %v146 = vpop.f32.mrf.mxu0
  %147 = vmatprep.mubr.bf16.mxu0 0
  %148 = vmatmul.mubr.bf16.gmra.mxu0 %v82
  %v149 = vpop.f32.mrf.mxu0
  %v150 = vadd.f32 %v66, %v149
  %v151 = vpop.f32.mrf.mxu0
  %v152 = vpop.f32.mrf.mxu0
  %v153 = vadd.f32 %v66, %v152
  %v154 = vpop.f32.mrf.mxu0
  %155 = vmatprep.mubr.bf16.mxu0 0
  %156 = vmatmul.mubr.bf16.gmra.mxu0 %v85
  %v157 = vpop.f32.mrf.mxu0
  %v158 = vadd.f32 %v66, %v157
  %v159 = vpop.f32.mrf.mxu0
  %v160 = vpop.f32.mrf.mxu0
  %v161 = vadd.f32 %v66, %v160
  %v162 = vpop.f32.mrf.mxu0
  %163 = vmatprep.mubr.bf16.mxu0 0
  %164 = vmatmul.mubr.bf16.gmra.mxu0 %v88
  %v165 = vpop.f32.mrf.mxu0
  %v166 = vadd.f32 %v66, %v165
  %v167 = vpop.f32.mrf.mxu0
  %v168 = vpop.f32.mrf.mxu0
  %v169 = vadd.f32 %v66, %v168
  %v170 = vpop.f32.mrf.mxu0
  %171 = vmatprep.mubr.bf16.mxu0 0
  %172 = vmatmul.mubr.bf16.gmra.mxu0 %v91
  %v173 = vpop.f32.mrf.mxu0
  %v174 = vadd.f32 %v66, %v173
  %v175 = vpop.f32.mrf.mxu0
  %v176 = vpop.f32.mrf.mxu0
  %v177 = vadd.f32 %v66, %v176
  %v178 = vpop.f32.mrf.mxu0
  %179 = vmatprep.mubr.bf16.mxu0 0
  %180 = vmatmul.mubr.bf16.gmra.mxu0 %v94
  %v181 = vpop.f32.mrf.mxu0
  %v182 = vadd.f32 %v66, %v181
  %v183 = vpop.f32.mrf.mxu0
  %v184 = vpop.f32.mrf.mxu0
  %v185 = vadd.f32 %v66, %v184
  %v186 = vpop.f32.mrf.mxu0
  %187 = vmatprep.mubr.bf16.mxu0 0
  %188 = vmatmul.mubr.bf16.gmra.mxu0 %v97
  %v189 = vpop.f32.mrf.mxu0
  %v190 = vadd.f32 %v66, %v189
  %v191 = vpop.f32.mrf.mxu0
  %v192 = vpop.f32.mrf.mxu0
  %v193 = vadd.f32 %v66, %v192
  %v194 = vpop.f32.mrf.mxu0
  %195 = vdwg.mxu0
  %v196 = vmax.f32 %v134, 0.0
  %v197 = vmax.f32 %v137, 0.0
  %v198 = vmax.f32 %v142, 0.0
  %v199 = vmax.f32 %v145, 0.0
  %v200 = vmax.f32 %v150, 0.0
  %v201 = vmax.f32 %v153, 0.0
  %v202 = vmax.f32 %v158, 0.0
  %v203 = vmax.f32 %v161, 0.0
  %v204 = vmax.f32 %v166, 0.0
  %v205 = vmax.f32 %v169, 0.0
  %v206 = vmax.f32 %v174, 0.0
  %v207 = vmax.f32 %v177, 0.0
  %v208 = vmax.f32 %v182, 0.0
  %v209 = vmax.f32 %v185, 0.0
  %v210 = vmax.f32 %v190, 0.0
  %v211 = vmax.f32 %v193, 0.0
  %v212 = vpack.c.bf16 %v197, %v196
  %v213 = vpack.c.bf16 %v199, %v198
  %v214 = vpack.c.bf16 %v201, %v200
  %v215 = vpack.c.bf16 %v203, %v202
  %v216 = vpack.c.bf16 %v205, %v204
  %v217 = vpack.c.bf16 %v207, %v206
  %v218 = vpack.c.bf16 %v209, %v208
  %v219 = vpack.c.bf16 %v211, %v210
  %v220 = vld [vmem:[%s3] sm:$0xf]
  %v221 = vld [vmem:[%s3 + $0x4] sm:$0xf]
  %v222 = vld [vmem:[%s3 + $0x8] sm:$0xf]
  %v223 = vld [vmem:[%s3 + $0xc] sm:$0xf]
  %v224 = vld [vmem:[%s3 + $0x10] sm:$0xf]
  %v225 = vld [vmem:[%s3 + $0x14] sm:$0xf]
  %v226 = vld [vmem:[%s3 + $0x18] sm:$0xf]
  %v227 = vld [vmem:[%s3 + $0x1c] sm:$0xf]
  %v228 = vld [vmem:[%s3 + $0x20] sm:$0xf]
  %v229 = vld [vmem:[%s3 + $0x24] sm:$0xf]
  %v230 = vld [vmem:[%s3 + $0x28] sm:$0xf]
  %v231 = vld [vmem:[%s3 + $0x2c] sm:$0xf]
  %v232 = vld [vmem:[%s3 + $0x30] sm:$0xf]
  %v233 = vld [vmem:[%s3 + $0x34] sm:$0xf]
  %v234 = vld [vmem:[%s3 + $0x38] sm:$0xf]
  %v235 = vld [vmem:[%s3 + $0x3c] sm:$0xf]
  %v236 = vld [vmem:[%s4] sm:$0x1]
  %v238 = vlaneseq
  %v239 = vshrl.u32 %v238, 7
  %v240 = vsub.s32 0, %v239
  %v241 = vrot.slane %v236, %v240
  %v259 = vunpack.c.l.b16 %v220
  %v260 = vunpack.c.l.b16 %v221
  %v261 = vunpack.c.l.b16 %v222
  %v262 = vunpack.c.l.b16 %v223
  %v263 = vunpack.c.l.b16 %v224
  %v264 = vunpack.c.l.b16 %v225
  %v265 = vunpack.c.l.b16 %v226
  %v266 = vunpack.c.l.b16 %v227
  %v267 = vunpack.c.l.b16 %v228
  %v268 = vunpack.c.l.b16 %v229
  %v269 = vunpack.c.l.b16 %v230
  %v270 = vunpack.c.l.b16 %v231
  %v271 = vunpack.c.l.b16 %v232
  %v272 = vunpack.c.l.b16 %v233
  %v273 = vunpack.c.l.b16 %v234
  %v274 = vunpack.c.l.b16 %v235
  %v275 = vpack.c.b16 %v260, %v259
  %v276 = vpack.c.b16 %v262, %v261
  %v277 = vpack.c.b16 %v264, %v263
  %v278 = vpack.c.b16 %v266, %v265
  %v279 = vpack.c.b16 %v268, %v267
  %v280 = vpack.c.b16 %v270, %v269
  %v281 = vpack.c.b16 %v272, %v271
  %v282 = vpack.c.b16 %v274, %v273
  %291 = vmatprep.subr.bf16.mxu0 0
  %292 = vmatpush1.bf16.msra.mxu0 %v282
  %293 = vmatprep.subr.bf16.mxu0 0
  %294 = vmatpush1.bf16.msra.mxu0 %v281
  %295 = vmatprep.subr.bf16.mxu0 0
  %296 = vmatpush1.bf16.msra.mxu0 %v280
  %297 = vmatprep.subr.bf16.mxu0 0
  %298 = vmatpush1.bf16.msra.mxu0 %v279
  %299 = vmatprep.subr.bf16.mxu0 0
  %300 = vmatpush1.bf16.msra.mxu0 %v278
  %301 = vmatprep.subr.bf16.mxu0 0
  %302 = vmatpush1.bf16.msra.mxu0 %v277
  %303 = vmatprep.subr.bf16.mxu0 0
  %304 = vmatpush1.bf16.msra.mxu0 %v276
  %305 = vmatprep.subr.bf16.mxu0 0
  %306 = vmatpush1.bf16.msra.mxu0 %v275
  %307 = vmatprep.subr.bf16.mxu0 0
  %308 = vmatpush2.bf16.msra.mxu0 0
  %309 = vmatprep.subr.bf16.mxu0 0
  %310 = vmatpush2.bf16.msra.mxu0 0
  %311 = vmatprep.subr.bf16.mxu0 0
  %312 = vmatpush2.bf16.msra.mxu0 0
  %313 = vmatprep.subr.bf16.mxu0 0
  %314 = vmatpush2.bf16.msra.mxu0 0
  %315 = vmatprep.subr.bf16.mxu0 0
  %316 = vmatpush2.bf16.msra.mxu0 0
  %317 = vmatprep.subr.bf16.mxu0 0
  %318 = vmatpush2.bf16.msra.mxu0 0
  %319 = vmatprep.subr.bf16.mxu0 0
  %320 = vmatpush2.bf16.msra.mxu0 0
  %321 = vmatprep.subr.bf16.mxu0 0
  %322 = vmatpush2.bf16.msra.mxu0 0
  %323 = vmatprep.mubr.bf16.mxu0 0
  %324 = vmatmul.mubr.bf16.gmra.mxu0 %v212
  %v325 = vpop.f32.mrf.mxu0
  %v326 = vadd.f32 %v241, %v325
  %v327 = vpop.f32.mrf.mxu0
  %v328 = vpop.f32.mrf.mxu0
  %v329 = vadd.f32 %v241, %v328
  %v330 = vpop.f32.mrf.mxu0
  %331 = vmatprep.mubr.bf16.mxu0 0
  %332 = vmatmul.mubr.bf16.gmra.mxu0 %v213
  %v333 = vpop.f32.mrf.mxu0
  %v334 = vadd.f32 %v241, %v333
  %v335 = vpop.f32.mrf.mxu0
  %v336 = vpop.f32.mrf.mxu0
  %v337 = vadd.f32 %v241, %v336
  %v338 = vpop.f32.mrf.mxu0
  %339 = vmatprep.mubr.bf16.mxu0 0
  %340 = vmatmul.mubr.bf16.gmra.mxu0 %v214
  %v341 = vpop.f32.mrf.mxu0
  %v342 = vadd.f32 %v241, %v341
  %v343 = vpop.f32.mrf.mxu0
  %v344 = vpop.f32.mrf.mxu0
  %v345 = vadd.f32 %v241, %v344
  %v346 = vpop.f32.mrf.mxu0
  %347 = vmatprep.mubr.bf16.mxu0 0
  %348 = vmatmul.mubr.bf16.gmra.mxu0 %v215
  %v349 = vpop.f32.mrf.mxu0
  %v350 = vadd.f32 %v241, %v349
  %v351 = vpop.f32.mrf.mxu0
  %v352 = vpop.f32.mrf.mxu0
  %v353 = vadd.f32 %v241, %v352
  %v354 = vpop.f32.mrf.mxu0
  %355 = vmatprep.mubr.bf16.mxu0 0
  %356 = vmatmul.mubr.bf16.gmra.mxu0 %v216
  %v357 = vpop.f32.mrf.mxu0
  %v358 = vadd.f32 %v241, %v357
  %v359 = vpop.f32.mrf.mxu0
  %v360 = vpop.f32.mrf.mxu0
  %v361 = vadd.f32 %v241, %v360
  %v362 = vpop.f32.mrf.mxu0
  %363 = vmatprep.mubr.bf16.mxu0 0
  %364 = vmatmul.mubr.bf16.gmra.mxu0 %v217
  %v365 = vpop.f32.mrf.mxu0
  %v366 = vadd.f32 %v241, %v365
  %v367 = vpop.f32.mrf.mxu0
  %v368 = vpop.f32.mrf.mxu0
  %v369 = vadd.f32 %v241, %v368
  %v370 = vpop.f32.mrf.mxu0
  %371 = vmatprep.mubr.bf16.mxu0 0
  %372 = vmatmul.mubr.bf16.gmra.mxu0 %v218
  %v373 = vpop.f32.mrf.mxu0
  %v374 = vadd.f32 %v241, %v373
  %v375 = vpop.f32.mrf.mxu0
  %v376 = vpop.f32.mrf.mxu0
  %v377 = vadd.f32 %v241, %v376
  %v378 = vpop.f32.mrf.mxu0
  %379 = vmatprep.mubr.bf16.mxu0 0
  %380 = vmatmul.mubr.bf16.gmra.mxu0 %v219
  %v381 = vpop.f32.mrf.mxu0
  %v382 = vadd.f32 %v241, %v381
  %v383 = vpop.f32.mrf.mxu0
  %v384 = vpop.f32.mrf.mxu0
  %v385 = vadd.f32 %v241, %v384
  %v386 = vpop.f32.mrf.mxu0
  %387 = vdwg.mxu0
  %v388 = vmax.f32 %v326, 0.0
  %v389 = vmax.f32 %v329, 0.0
  %v390 = vmax.f32 %v334, 0.0
  %v391 = vmax.f32 %v337, 0.0
  %v392 = vmax.f32 %v342, 0.0
  %v393 = vmax.f32 %v345, 0.0
  %v394 = vmax.f32 %v350, 0.0
  %v395 = vmax.f32 %v353, 0.0
  %v396 = vmax.f32 %v358, 0.0
  %v397 = vmax.f32 %v361, 0.0
  %v398 = vmax.f32 %v366, 0.0
  %v399 = vmax.f32 %v369, 0.0
  %v400 = vmax.f32 %v374, 0.0
  %v401 = vmax.f32 %v377, 0.0
  %v402 = vmax.f32 %v382, 0.0
  %v403 = vmax.f32 %v385, 0.0
  %v404 = vpack.c.bf16 %v389, %v388
  %v405 = vpack.c.bf16 %v391, %v390
  %v406 = vpack.c.bf16 %v393, %v392
  %v407 = vpack.c.bf16 %v395, %v394
  %v408 = vpack.c.bf16 %v397, %v396
  %v409 = vpack.c.bf16 %v399, %v398
  %v410 = vpack.c.bf16 %v401, %v400
  %v411 = vpack.c.bf16 %v403, %v402
  %v412 = vld [vmem:[%s5] sm:$0xf]
  %v413 = vld [vmem:[%s5 + $0x4] sm:$0xf]
  %v414 = vld [vmem:[%s5 + $0x8] sm:$0xf]
  %v415 = vld [vmem:[%s5 + $0xc] sm:$0xf]
  %v416 = vld [vmem:[%s5 + $0x10] sm:$0xf]
  %v417 = vld [vmem:[%s5 + $0x14] sm:$0xf]
  %v418 = vld [vmem:[%s5 + $0x18] sm:$0xf]
  %v419 = vld [vmem:[%s5 + $0x1c] sm:$0xf]
  %v420 = vld [vmem:[%s5 + $0x20] sm:$0xf]
  %v421 = vld [vmem:[%s5 + $0x24] sm:$0xf]
  %v422 = vld [vmem:[%s5 + $0x28] sm:$0xf]
  %v423 = vld [vmem:[%s5 + $0x2c] sm:$0xf]
  %v424 = vld [vmem:[%s5 + $0x30] sm:$0xf]
  %v425 = vld [vmem:[%s5 + $0x34] sm:$0xf]
  %v426 = vld [vmem:[%s5 + $0x38] sm:$0xf]
  %v427 = vld [vmem:[%s5 + $0x3c] sm:$0xf]
  %v428 = vld [vmem:[%s6] sm:$0x1]
  %v430 = vlaneseq
  %v431 = vshrl.u32 %v430, 7
  %v432 = vsub.s32 0, %v431
  %v433 = vrot.slane %v428, %v432
  %v451 = vunpack.c.l.b16 %v412
  %v452 = vunpack.c.l.b16 %v413
  %v453 = vunpack.c.l.b16 %v414
  %v454 = vunpack.c.l.b16 %v415
  %v455 = vunpack.c.l.b16 %v416
  %v456 = vunpack.c.l.b16 %v417
  %v457 = vunpack.c.l.b16 %v418
  %v458 = vunpack.c.l.b16 %v419
  %v459 = vunpack.c.l.b16 %v420
  %v460 = vunpack.c.l.b16 %v421
  %v461 = vunpack.c.l.b16 %v422
  %v462 = vunpack.c.l.b16 %v423
  %v463 = vunpack.c.l.b16 %v424
  %v464 = vunpack.c.l.b16 %v425
  %v465 = vunpack.c.l.b16 %v426
  %v466 = vunpack.c.l.b16 %v427
  %v467 = vpack.c.b16 %v452, %v451
  %v468 = vpack.c.b16 %v454, %v453
  %v469 = vpack.c.b16 %v456, %v455
  %v470 = vpack.c.b16 %v458, %v457
  %v471 = vpack.c.b16 %v460, %v459
  %v472 = vpack.c.b16 %v462, %v461
  %v473 = vpack.c.b16 %v464, %v463
  %v474 = vpack.c.b16 %v466, %v465
  %483 = vmatprep.subr.bf16.mxu0 0
  %484 = vmatpush1.bf16.msra.mxu0 %v474
  %485 = vmatprep.subr.bf16.mxu0 0
  %486 = vmatpush1.bf16.msra.mxu0 %v473
  %487 = vmatprep.subr.bf16.mxu0 0
  %488 = vmatpush1.bf16.msra.mxu0 %v472
  %489 = vmatprep.subr.bf16.mxu0 0
  %490 = vmatpush1.bf16.msra.mxu0 %v471
  %491 = vmatprep.subr.bf16.mxu0 0
  %492 = vmatpush1.bf16.msra.mxu0 %v470
  %493 = vmatprep.subr.bf16.mxu0 0
  %494 = vmatpush1.bf16.msra.mxu0 %v469
  %495 = vmatprep.subr.bf16.mxu0 0
  %496 = vmatpush1.bf16.msra.mxu0 %v468
  %497 = vmatprep.subr.bf16.mxu0 0
  %498 = vmatpush1.bf16.msra.mxu0 %v467
  %499 = vmatprep.subr.bf16.mxu0 0
  %500 = vmatpush2.bf16.msra.mxu0 0
  %501 = vmatprep.subr.bf16.mxu0 0
  %502 = vmatpush2.bf16.msra.mxu0 0
  %503 = vmatprep.subr.bf16.mxu0 0
  %504 = vmatpush2.bf16.msra.mxu0 0
  %505 = vmatprep.subr.bf16.mxu0 0
  %506 = vmatpush2.bf16.msra.mxu0 0
  %507 = vmatprep.subr.bf16.mxu0 0
  %508 = vmatpush2.bf16.msra.mxu0 0
  %509 = vmatprep.subr.bf16.mxu0 0
  %510 = vmatpush2.bf16.msra.mxu0 0
  %511 = vmatprep.subr.bf16.mxu0 0
  %512 = vmatpush2.bf16.msra.mxu0 0
  %513 = vmatprep.subr.bf16.mxu0 0
  %514 = vmatpush2.bf16.msra.mxu0 0
  %515 = vmatprep.mubr.bf16.mxu0 0
  %516 = vmatmul.mubr.bf16.gmra.mxu0 %v404
  %v517 = vpop.f32.mrf.mxu0
  %v518 = vadd.f32 %v433, %v517
  %v519 = vpop.f32.mrf.mxu0
  %v520 = vpop.f32.mrf.mxu0
  %v521 = vadd.f32 %v433, %v520
  %v522 = vpop.f32.mrf.mxu0
  %523 = vmatprep.mubr.bf16.mxu0 0
  %524 = vmatmul.mubr.bf16.gmra.mxu0 %v405
  %v525 = vpop.f32.mrf.mxu0
  %v526 = vadd.f32 %v433, %v525
  %v527 = vpop.f32.mrf.mxu0
  %v528 = vpop.f32.mrf.mxu0
  %v529 = vadd.f32 %v433, %v528
  %v530 = vpop.f32.mrf.mxu0
  %531 = vmatprep.mubr.bf16.mxu0 0
  %532 = vmatmul.mubr.bf16.gmra.mxu0 %v406
  %v533 = vpop.f32.mrf.mxu0
  %v534 = vadd.f32 %v433, %v533
  %v535 = vpop.f32.mrf.mxu0
  %v536 = vpop.f32.mrf.mxu0
  %v537 = vadd.f32 %v433, %v536
  %v538 = vpop.f32.mrf.mxu0
  %539 = vmatprep.mubr.bf16.mxu0 0
  %540 = vmatmul.mubr.bf16.gmra.mxu0 %v407
  %v541 = vpop.f32.mrf.mxu0
  %v542 = vadd.f32 %v433, %v541
  %v543 = vpop.f32.mrf.mxu0
  %v544 = vpop.f32.mrf.mxu0
  %v545 = vadd.f32 %v433, %v544
  %v546 = vpop.f32.mrf.mxu0
  %547 = vmatprep.mubr.bf16.mxu0 0
  %548 = vmatmul.mubr.bf16.gmra.mxu0 %v408
  %v549 = vpop.f32.mrf.mxu0
  %v550 = vadd.f32 %v433, %v549
  %v551 = vpop.f32.mrf.mxu0
  %v552 = vpop.f32.mrf.mxu0
  %v553 = vadd.f32 %v433, %v552
  %v554 = vpop.f32.mrf.mxu0
  %555 = vmatprep.mubr.bf16.mxu0 0
  %556 = vmatmul.mubr.bf16.gmra.mxu0 %v409
  %v557 = vpop.f32.mrf.mxu0
  %v558 = vadd.f32 %v433, %v557
  %v559 = vpop.f32.mrf.mxu0
  %v560 = vpop.f32.mrf.mxu0
  %v561 = vadd.f32 %v433, %v560
  %v562 = vpop.f32.mrf.mxu0
  %563 = vmatprep.mubr.bf16.mxu0 0
  %564 = vmatmul.mubr.bf16.gmra.mxu0 %v410
  %v565 = vpop.f32.mrf.mxu0
  %v566 = vadd.f32 %v433, %v565
  %v567 = vpop.f32.mrf.mxu0
  %v568 = vpop.f32.mrf.mxu0
  %v569 = vadd.f32 %v433, %v568
  %v570 = vpop.f32.mrf.mxu0
  %571 = vmatprep.mubr.bf16.mxu0 0
  %572 = vmatmul.mubr.bf16.gmra.mxu0 %v411
  %v573 = vpop.f32.mrf.mxu0
  %v574 = vadd.f32 %v433, %v573
  %v575 = vpop.f32.mrf.mxu0
  %v576 = vpop.f32.mrf.mxu0
  %v577 = vadd.f32 %v433, %v576
  %v578 = vpop.f32.mrf.mxu0
  %579 = vdwg.mxu0
  %v580 = vmax.f32 %v518, 0.0
  %v581 = vmax.f32 %v521, 0.0
  %v582 = vmax.f32 %v526, 0.0
  %v583 = vmax.f32 %v529, 0.0
  %v584 = vmax.f32 %v534, 0.0
  %v585 = vmax.f32 %v537, 0.0
  %v586 = vmax.f32 %v542, 0.0
  %v587 = vmax.f32 %v545, 0.0
  %v588 = vmax.f32 %v550, 0.0
  %v589 = vmax.f32 %v553, 0.0
  %v590 = vmax.f32 %v558, 0.0
  %v591 = vmax.f32 %v561, 0.0
  %v592 = vmax.f32 %v566, 0.0
  %v593 = vmax.f32 %v569, 0.0
  %v594 = vmax.f32 %v574, 0.0
  %v595 = vmax.f32 %v577, 0.0
  %v596 = vld [vmem:[%s7] sm:$0x1]
  %v598 = vlaneseq
  %v599 = vshrl.u32 %v598, 7
  %v600 = vsub.s32 0, %v599
  %v601 = vrot.slane %v596, %v600
  %v603 = vmul.f32 %v580, %v601
  %v604 = vmul.f32 %v581, %v601
  %v605 = vmul.f32 %v582, %v601
  %v606 = vmul.f32 %v583, %v601
  %v607 = vmul.f32 %v584, %v601
  %v608 = vmul.f32 %v585, %v601
  %v609 = vmul.f32 %v586, %v601
  %v610 = vmul.f32 %v587, %v601
  %v611 = vmul.f32 %v588, %v601
  %v612 = vmul.f32 %v589, %v601
  %v613 = vmul.f32 %v590, %v601
  %v614 = vmul.f32 %v591, %v601
  %v615 = vmul.f32 %v592, %v601
  %v616 = vmul.f32 %v593, %v601
  %v617 = vmul.f32 %v594, %v601
  %v618 = vmul.f32 %v595, %v601
  %619 = vadd.xlane.f32.xlu0 %v603
  %v620 = vpop.xlane.xlu0 %619
  %621 = vadd.xlane.f32.xlu0 %v604
  %v622 = vpop.xlane.xlu0 %621
  %623 = vadd.xlane.f32.xlu0 %v605
  %v624 = vpop.xlane.xlu0 %623
  %625 = vadd.xlane.f32.xlu0 %v606
  %v626 = vpop.xlane.xlu0 %625
  %627 = vadd.xlane.f32.xlu0 %v607
  %v628 = vpop.xlane.xlu0 %627
  %629 = vadd.xlane.f32.xlu0 %v608
  %v630 = vpop.xlane.xlu0 %629
  %631 = vadd.xlane.f32.xlu0 %v609
  %v632 = vpop.xlane.xlu0 %631
  %633 = vadd.xlane.f32.xlu0 %v610
  %v634 = vpop.xlane.xlu0 %633
  %635 = vadd.xlane.f32.xlu0 %v611
  %v636 = vpop.xlane.xlu0 %635
  %637 = vadd.xlane.f32.xlu0 %v612
  %v638 = vpop.xlane.xlu0 %637
  %639 = vadd.xlane.f32.xlu0 %v613
  %v640 = vpop.xlane.xlu0 %639
  %641 = vadd.xlane.f32.xlu0 %v614
  %v642 = vpop.xlane.xlu0 %641
  %643 = vadd.xlane.f32.xlu0 %v615
  %v644 = vpop.xlane.xlu0 %643
  %645 = vadd.xlane.f32.xlu0 %v616
  %v646 = vpop.xlane.xlu0 %645
  %647 = vadd.xlane.f32.xlu0 %v617
  %v648 = vpop.xlane.xlu0 %647
  %649 = vadd.xlane.f32.xlu0 %v618
  %v650 = vpop.xlane.xlu0 %649
  %v651 = vld [vmem:[#allocation2] sm:$0x1]
  %v653 = vlaneseq
  %v654 = vshrl.u32 %v653, 7
  %v655 = vsub.s32 0, %v654
  %v656 = vrot.slane %v651, %v655
  %v658 = vadd.f32 %v620, %v656
  %v659 = vadd.f32 %v622, %v656
  %v660 = vadd.f32 %v624, %v656
  %v661 = vadd.f32 %v626, %v656
  %v662 = vadd.f32 %v628, %v656
  %v663 = vadd.f32 %v630, %v656
  %v664 = vadd.f32 %v632, %v656
  %v665 = vadd.f32 %v634, %v656
  %v666 = vadd.f32 %v636, %v656
  %v667 = vadd.f32 %v638, %v656
  %v668 = vadd.f32 %v640, %v656
  %v669 = vadd.f32 %v642, %v656
  %v670 = vadd.f32 %v644, %v656
  %v671 = vadd.f32 %v646, %v656
  %v672 = vadd.f32 %v648, %v656
  %v673 = vadd.f32 %v650, %v656
  %vm674 = vcmask 7168
  %675 = vst.msk [vmem:[%s9] sm:$0xff] %vm674, %v658
  %676 = vst.msk [vmem:[%s9 + $0x8] sm:$0xff] %vm674, %v659
  %677 = vst.msk [vmem:[%s9 + $0x10] sm:$0xff] %vm674, %v660
  %678 = vst.msk [vmem:[%s9 + $0x18] sm:$0xff] %vm674, %v661
  %679 = vst.msk [vmem:[%s9 + $0x20] sm:$0xff] %vm674, %v662
  %680 = vst.msk [vmem:[%s9 + $0x28] sm:$0xff] %vm674, %v663
  %681 = vst.msk [vmem:[%s9 + $0x30] sm:$0xff] %vm674, %v664
  %682 = vst.msk [vmem:[%s9 + $0x38] sm:$0xff] %vm674, %v665
  %683 = vst.msk [vmem:[%s9 + $0x40] sm:$0xff] %vm674, %v666
  %684 = vst.msk [vmem:[%s9 + $0x48] sm:$0xff] %vm674, %v667
  %685 = vst.msk [vmem:[%s9 + $0x50] sm:$0xff] %vm674, %v668
  %686 = vst.msk [vmem:[%s9 + $0x58] sm:$0xff] %vm674, %v669
  %687 = vst.msk [vmem:[%s9 + $0x60] sm:$0xff] %vm674, %v670
  %688 = vst.msk [vmem:[%s9 + $0x68] sm:$0xff] %vm674, %v671
  %689 = vst.msk [vmem:[%s9 + $0x70] sm:$0xff] %vm674, %v672
  %690 = vst.msk [vmem:[%s9 + $0x78] sm:$0xff] %vm674, %v673
  // Predicated region
  $region38: #{tpu_custom_call.1} parent=0 // pred_check
    _
  $region39: #{tpu_custom_call.1} parent=0 // pred_check_branch
    %692 = sbr.rel (0) target = $region41
  $region40: #{tpu_custom_call.1} parent=0 // pred_region
    _
  $region41: #{tpu_custom_call.1} parent=0 // pred_fallthru
    _
  // Predicated region
  $region42: #{tpu_custom_call.1} parent=0 // pred_check
    _
  $region43: #{tpu_custom_call.1} parent=0 // pred_check_branch
    %694 = sbr.rel (0) target = $region45
  $region44: #{tpu_custom_call.1} parent=0 // pred_region
    _
  $region45: #{tpu_custom_call.1} parent=0 // pred_fallthru
    _

</llo_original>
